<compile_context>
chip_gen: v7x
topology: tpu7x:2x2x1
jax: 0.10.0
libtpu: 0.0.40
codegen_flags: <defaults>
</compile_context>

<pallas_src>
import functools

import jax
import jax.numpy as jnp
from jax.experimental import pallas as pl
from jax.experimental.pallas import tpu as pltpu

EPS_GEN = 1e-7     # GENConv message eps
LN_EPS = 1e-5      # torch.nn.LayerNorm default eps


def _round_up(x, m):
    return ((x + m - 1) // m) * m


def _pick_tile(n, candidates):
    """Largest dividing tile; prefer an even #tiles (v7x megacore) if within 2x of best."""
    divs = [c for c in candidates if n % c == 0]
    if not divs:
        return n
    best = max(divs)
    even = [c for c in divs if (n // c) >= 2 and (n // c) % 2 == 0]
    if even and max(even) * 2 >= best:
        return max(even)
    return best


# ----------------------------- Pallas kernels ------------------------------

def _linear_relu_kernel(x_ref, w_ref, b_ref, o_ref, st_ref):
    xb = x_ref[...].astype(jnp.bfloat16)
    y = jnp.dot(xb, w_ref[...], preferred_element_type=jnp.float32) + b_ref[...]
    h = jnp.maximum(y, 0.0)
    o_ref[...] = h.astype(o_ref.dtype)
    # per-tile column max/min of msg = relu(h)+eps (h >= 0 already): feeds the next
    # GENConv layer's softmax shift without an extra HBM pass.
    msg = h + EPS_GEN
    st_ref[0] = jnp.concatenate([jnp.max(msg, axis=0, keepdims=True),
                                 jnp.min(msg, axis=0, keepdims=True)], axis=0)


def linear_relu(x, w, b, tile):
    n, k = x.shape
    m = w.shape[1]
    nt = n // tile
    return pl.pallas_call(
        _linear_relu_kernel,
        grid=(nt,),
        in_specs=[pl.BlockSpec((tile, k), lambda i: (i, 0)),
                  pl.BlockSpec((k, m), lambda i: (0, 0)),
                  pl.BlockSpec((1, m), lambda i: (0, 0))],
        out_specs=(pl.BlockSpec((tile, m), lambda i: (i, 0)),
                   pl.BlockSpec((1, 2, m), lambda i: (i, 0, 0))),
        out_shape=(jax.ShapeDtypeStruct((n, m), jnp.float32),
                   jax.ShapeDtypeStruct((nt, 2, m), jnp.float32)),
        compiler_params=pltpu.CompilerParams(dimension_semantics=("parallel",)),
    )(x, w.astype(jnp.bfloat16), b.reshape(1, m))


def _gen_msg_kernel(x_ref, t_ref, shift_ref, o_ref):
    # msg = relu(x)+eps ; E = exp(t*msg - shift); shift is a per-channel constant so
    # it cancels in num/den of the softmax aggregation. Output is the fused [E | E*msg].
    x = x_ref[...]
    msg = jnp.maximum(x, 0.0) + EPS_GEN
    e = jnp.exp(msg * t_ref[...] - shift_ref[...])
    o_ref[...] = jnp.concatenate([e, e * msg], axis=-1).astype(o_ref.dtype)


def _gen_agg_kernel(cnt_ref, sl_ref, mask_ref, ee_ref, xd_ref, w1_ref, b1_ref, g1_ref,
                    be1_ref, w2_ref, b2_ref, ng_ref, nb_ref, o_ref, st_ref, acc, *, res, c):
    del sl_ref  # src-tile list only drives the index_maps
    i = pl.program_id(0)
    k = pl.program_id(1)

    @pl.when(k == 0)
    def _():
        acc[...] = jnp.zeros_like(acc)

    # Only occupied src tiles contribute; empty-tail steps reuse the previous DMA'd
    # block (index unchanged) and skip the MXU work entirely.
    @pl.when(k < cnt_ref[i])
    def _():
        m = mask_ref[...].astype(jnp.bfloat16)                   # int8 -> bf16 in VMEM
        acc[...] += jnp.dot(m, ee_ref[...], preferred_element_type=jnp.float32)

    @pl.when(k == pl.num_programs(1) - 1)
    def _():
        x_dst = xd_ref[...]
        accv = acc[...]
        den = accv[:, :c]
        num = accv[:, c:]
        # isolated-node guard: den == 0 -> num == 0 -> agg = 0 (no NaN)
        agg = num / jnp.maximum(den, 1e-16)
        out = agg + x_dst                                        # GENConv root add
        # GENConv MLP: Linear(C,2C) -> LayerNorm -> ReLU -> Linear(2C,C)
        h = jnp.dot(out.astype(jnp.bfloat16), w1_ref[...],
                    preferred_element_type=jnp.float32) + b1_ref[...]
        mu = jnp.mean(h, axis=-1, keepdims=True)
        var = jnp.mean((h - mu) ** 2, axis=-1, keepdims=True)
        h = (h - mu) * jax.lax.rsqrt(var + LN_EPS) * g1_ref[...] + be1_ref[...]
        h = jnp.maximum(h, 0.0)
        h = jnp.dot(h.astype(jnp.bfloat16), w2_ref[...],
                    preferred_element_type=jnp.float32) + b2_ref[...]
        if res:
            # fused DeepGCNLayer(block='res'): x + relu(LayerNorm(conv(x)))
            mu2 = jnp.mean(h, axis=-1, keepdims=True)
            var2 = jnp.mean((h - mu2) ** 2, axis=-1, keepdims=True)
            hn = (h - mu2) * jax.lax.rsqrt(var2 + LN_EPS) * ng_ref[...] + nb_ref[...]
            h = x_dst + jnp.maximum(hn, 0.0)
        o_ref[...] = h.astype(o_ref.dtype)
        # per-tile msg stats for the next layer's softmax shift (free HBM-pass removal)
        msg = jnp.maximum(h, 0.0) + EPS_GEN
        st_ref[0] = jnp.concatenate([jnp.max(msg, axis=0, keepdims=True),
                                     jnp.min(msg, axis=0, keepdims=True)], axis=0)


def _softmax_shift(stats, t):
    # shift >= max over nodes of t*msg regardless of sign(t); exact value is irrelevant
    # for correctness (it cancels) — only numerical stability matters.
    gmax = jnp.max(stats[:, 0, :], axis=0, keepdims=True)
    gmin = jnp.min(stats[:, 1, :], axis=0, keepdims=True)
    return jnp.maximum(t * gmax, t * gmin)


def genconv_layer(x, x_stats, adj_i8, counts, src_list, lp, *, res,
                  tile_dst, tile_src, tile_node):
    n, c = x.shape
    c2 = lp["w1"].shape[1]
    t = lp["t"]
    shift = _softmax_shift(x_stats, t)                           # [1, C]

    ee = pl.pallas_call(
        _gen_msg_kernel,
        grid=(n // tile_node,),
        in_specs=[pl.BlockSpec((tile_node, c), lambda i: (i, 0)),
                  pl.BlockSpec((1, 1), lambda i: (0, 0)),
                  pl.BlockSpec((1, c), lambda i: (0, 0))],
        out_specs=pl.BlockSpec((tile_node, 2 * c), lambda i: (i, 0)),
        out_shape=jax.ShapeDtypeStruct((n, 2 * c), jnp.bfloat16),
        compiler_params=pltpu.CompilerParams(dimension_semantics=("parallel",)),
    )(x, t, shift)

    nd, ns = n // tile_dst, n // tile_src
    out, stats = pl.pallas_call(
        functools.partial(_gen_agg_kernel, res=res, c=c),
        grid_spec=pltpu.PrefetchScalarGridSpec(
            num_scalar_prefetch=2,
            grid=(nd, ns),
            in_specs=[
                # adjacency tile (int8), src-tile index from the scalar-prefetched plan
                pl.BlockSpec((tile_dst, tile_src), lambda i, k, cnt, sl: (i, sl[i, k]),
                             pipeline_mode=pl.Buffered(3)),
                # fused [E | E*msg] src tile (bf16, 2C wide -> one full-width MXU matmul)
                pl.BlockSpec((tile_src, 2 * c), lambda i, k, cnt, sl: (sl[i, k], 0),
                             pipeline_mode=pl.Buffered(3)),
                pl.BlockSpec((tile_dst, c), lambda i, k, cnt, sl: (i, 0)),   # x (dst rows)
                pl.BlockSpec((c, c2), lambda i, k, cnt, sl: (0, 0)),         # w1
                pl.BlockSpec((1, c2), lambda i, k, cnt, sl: (0, 0)),         # b1
                pl.BlockSpec((1, c2), lambda i, k, cnt, sl: (0, 0)),         # MLP LN gamma
                pl.BlockSpec((1, c2), lambda i, k, cnt, sl: (0, 0)),         # MLP LN beta
                pl.BlockSpec((c2, c), lambda i, k, cnt, sl: (0, 0)),         # w2
                pl.BlockSpec((1, c), lambda i, k, cnt, sl: (0, 0)),          # b2
                pl.BlockSpec((1, c), lambda i, k, cnt, sl: (0, 0)),          # DeepGCN LN gamma
                pl.BlockSpec((1, c), lambda i, k, cnt, sl: (0, 0)),          # DeepGCN LN beta
            ],
            out_specs=(pl.BlockSpec((tile_dst, c), lambda i, k, cnt, sl: (i, 0)),
                       pl.BlockSpec((1, 2, c), lambda i, k, cnt, sl: (i, 0, 0))),
            scratch_shapes=[pltpu.VMEM((tile_dst, 2 * c), jnp.float32)]),
        out_shape=(jax.ShapeDtypeStruct((n, c), jnp.float32),
                   jax.ShapeDtypeStruct((nd, 2, c), jnp.float32)),
        compiler_params=pltpu.CompilerParams(
            dimension_semantics=("parallel", "arbitrary"),
            vmem_limit_bytes=48 * 1024 * 1024),
    )(counts, src_list, adj_i8, ee, x,
      lp["w1"].astype(jnp.bfloat16), lp["b1"].reshape(1, c2),
      lp["ln_g"].reshape(1, c2), lp["ln_b"].reshape(1, c2),
      lp["w2"].astype(jnp.bfloat16), lp["b2"].reshape(1, c),
      lp["norm_g"].reshape(1, c), lp["norm_b"].reshape(1, c))
    return out, stats


def _phi_kernel(h_ref, c1_ref, c2_ref, c3_ref, w_ref, b_ref, o_ref):
    # per-tile VMEM concat of the four 128-wide feature blocks -> one K=512 matmul
    xc = jnp.concatenate([h_ref[...], c1_ref[...], c2_ref[...], c3_ref[...]], axis=-1)
    y = jnp.dot(xc.astype(jnp.bfloat16), w_ref[...],
                preferred_element_type=jnp.float32) + b_ref[...]
    o_ref[...] = jnp.maximum(y, 0.0).astype(o_ref.dtype)


def phi_fused(h, c1, x2, x3, w, b, tile):
    n, c = h.shape
    d = w.shape[1]
    return pl.pallas_call(
        _phi_kernel,
        grid=(n // tile,),
        in_specs=[pl.BlockSpec((tile, c), lambda i: (i, 0))] * 4 +
                 [pl.BlockSpec((4 * c, d), lambda i: (0, 0)),
                  pl.BlockSpec((1, d), lambda i: (0, 0))],
        out_specs=pl.BlockSpec((tile, d), lambda i: (i, 0)),
        # bf16 output: halves hp HBM traffic and the attention kernel's VMEM residency
        out_shape=jax.ShapeDtypeStruct((n, d), jnp.bfloat16),
        compiler_params=pltpu.CompilerParams(dimension_semantics=("parallel",)),
    )(h, c1, x2, x3, w.astype(jnp.bfloat16), b.reshape(1, d))


def _attn_kernel(hp_ref, wab_ref, bab_ref, wc_ref, bc_ref, wr_ref, br_ref, wk_ref, bk_ref,
                 a_ref, logit_ref, m_sc, l_sc, acc_sc, *, d, chunk, m_real):
    # Flash-style online softmax over per-graph node chunks: no whole-graph [M, D]
    # residency in VMEM (v7x 64 MiB safe); padded rows masked to -inf.
    j = pl.program_id(1)

    @pl.when(j == 0)
    def _():
        m_sc[...] = jnp.full_like(m_sc, -jnp.inf)
        l_sc[...] = jnp.zeros_like(l_sc)
        acc_sc[...] = jnp.zeros_like(acc_sc)

    h = hp_ref[...]                                              # [chunk, D] bf16
    # fused a|b gate matmul: [chunk, D] @ [D, 2D]
    ab = jnp.dot(h, wab_ref[...], preferred_element_type=jnp.float32) + bab_ref[...]
    a = jnp.tanh(ab[:, :d])                                      # f32 EUP (v5e-safe)
    g = jax.nn.sigmoid(ab[:, d:])
    ag = (a * g).astype(jnp.bfloat16)                            # [chunk, D]
    # attention logits as a lane-dense row: (1,D)x(chunk,D)^T -> (1, chunk)
    att = jax.lax.dot_general(wc_ref[...], ag, (((1,), (1,)), ((), ())),
                              preferred_element_type=jnp.float32) + bc_ref[...]
    a_ref[0] = att.astype(a_ref.dtype)                           # raw pre-softmax logits

    node_idx = j * chunk + jax.lax.broadcasted_iota(jnp.int32, (1, chunk), 1)
    att_m = jnp.where(node_idx < m_real, att, -jnp.inf)          # mask per-graph padding

    mx = jnp.maximum(m_sc[...], jnp.max(att_m, axis=-1, keepdims=True))
    scale = jnp.exp(m_sc[...] - mx)
    p = jnp.exp(att_m - mx)                                      # [1, chunk]
    l_sc[...] = scale * l_sc[...] + jnp.sum(p, axis=-1, keepdims=True)
    acc_sc[...] = scale * acc_sc[...] + jnp.dot(p.astype(jnp.bfloat16), h,
                                                preferred_element_type=jnp.float32)
    m_sc[...] = mx

    @pl.when(j == pl.num_programs(1) - 1)
    def _():
        pooled = acc_sc[...] * pl.reciprocal(l_sc[...], approx=True)   # [1, D]
        # fused path_rho (Linear+ReLU) and classifier
        hr = jnp.dot(pooled.astype(jnp.bfloat16), wr_ref[...],
                     preferred_element_type=jnp.float32) + br_ref[...]
        hr = jnp.maximum(hr, 0.0)
        lg = jnp.dot(hr.astype(jnp.bfloat16), wk_ref[...],
                     preferred_element_type=jnp.float32) + bk_ref[...]
        logit_ref[0] = lg.astype(logit_ref.dtype)


def attention_head(hp, params, batch_size, m_pad, m_real):
    n_pad, d = hp.shape
    nc = params["cls_w"].shape[1]
    chunk = _pick_tile(m_pad, (2048, 1024, 512, 256, 128))
    n_chunks = m_pad // chunk
    wab = jnp.concatenate([params["attn_a_w"], params["attn_b_w"]], axis=1).astype(jnp.bfloat16)
    bab = jnp.concatenate([params["attn_a_b"], params["attn_b_b"]], axis=0).reshape(1, 2 * d)
    wc = params["attn_c_w"].reshape(1, d).astype(jnp.bfloat16)
    bc = params["attn_c_b"].reshape(1, 1)
    wr = params["rho_w"].astype(jnp.bfloat16)
    br = params["rho_b"].reshape(1, d)
    wk = params["cls_w"].astype(jnp.bfloat16)
    bk = params["cls_b"].reshape(1, nc)
    return pl.pallas_call(
        functools.partial(_attn_kernel, d=d, chunk=chunk, m_real=m_real),
        grid=(batch_size, n_chunks),
        in_specs=[
            # read directly from the flat padded hp layout: no slice/reshape HBM round-trip
            pl.BlockSpec((chunk, d), lambda b, j: (b * n_chunks + j, 0)),
            pl.BlockSpec((d, 2 * d), lambda b, j: (0, 0)),
            pl.BlockSpec((1, 2 * d), lambda b, j: (0, 0)),
            pl.BlockSpec((1, d), lambda b, j: (0, 0)),
            pl.BlockSpec((1, 1), lambda b, j: (0, 0)),
            pl.BlockSpec((d, d), lambda b, j: (0, 0)),
            pl.BlockSpec((1, d), lambda b, j: (0, 0)),
            pl.BlockSpec((d, nc), lambda b, j: (0, 0)),
            pl.BlockSpec((1, nc), lambda b, j: (0, 0)),
        ],
        out_specs=(pl.BlockSpec((1, 1, chunk), lambda b, j: (b, 0, j)),
                   pl.BlockSpec((1, 1, nc), lambda b, j: (b, 0, 0))),
        out_shape=(jax.ShapeDtypeStruct((batch_size, 1, m_pad), jnp.float32),
                   jax.ShapeDtypeStruct((batch_size, 1, nc), jnp.float32)),
        scratch_shapes=[pltpu.VMEM((1, 1), jnp.float32),
                        pltpu.VMEM((1, 1), jnp.float32),
                        pltpu.VMEM((1, d), jnp.float32)],
        compiler_params=pltpu.CompilerParams(dimension_semantics=("parallel", "arbitrary")),
    )(hp, wab, bab, wc, bc, wr, br, wk, bk)


# ------------------------- block-sparse adjacency plan ----------------------

def _block_sparse_plan(adj_i8, tile_dst, tile_src):
    n = adj_i8.shape[0]
    nd, ns = n // tile_dst, n // tile_src
    occ = jnp.any((adj_i8 != 0).reshape(nd, tile_dst, ns, tile_src), axis=(1, 3))
    counts = jnp.sum(occ, axis=1).astype(jnp.int32)                       # [nd]
    order = jnp.argsort(jnp.where(occ, 0, 1), axis=1).astype(jnp.int32)   # occupied first (stable)
    last = jnp.take_along_axis(order, jnp.maximum(counts - 1, 0)[:, None], axis=1)
    kio = jnp.arange(ns, dtype=jnp.int32)[None, :]
    # pad the tail by repeating the last valid block -> unchanged DMA index on skipped steps
    src_list = jnp.where(kio < counts[:, None], order, last)
    return counts, src_list


# ----------------------------- model wrapper -------------------------------

def patchgcn_forward(x, adj_mask, params, batch_size):
    n_real, feat_dim = x.shape
    assert n_real % batch_size == 0, "nodes must split evenly across graphs"
    m_real = n_real // batch_size
    m_pad = _round_up(m_real, 128)            # per-graph, 128-aligned (lane-dense attention chunks)
    n_pad = batch_size * m_pad

    if m_pad != m_real:
        x = (jnp.zeros((batch_size, m_pad, feat_dim), x.dtype)
             .at[:, :m_real, :].set(x.reshape(batch_size, m_real, feat_dim))
             .reshape(n_pad, feat_dim))
        a4 = adj_mask.reshape(batch_size, m_real, batch_size, m_real)
        adj_i8 = (jnp.zeros((batch_size, m_pad, batch_size, m_pad), jnp.int8)
                  .at[:, :m_real, :, :m_real].set(a4.astype(jnp.int8))
                  .reshape(n_pad, n_pad))
    else:
        adj_i8 = adj_mask.astype(jnp.int8)

    tile_node = _pick_tile(n_pad, (1024, 512, 256, 128))
    tile_dst = _pick_tile(n_pad, (2048, 1024, 512, 256, 128))
    tile_src = max(c for c in (512, 256, 128) if n_pad % c == 0)

    counts, src_list = _block_sparse_plan(adj_i8, tile_dst, tile_src)

    # fc: Linear(384,128) + ReLU (+ dropout=id); also emits per-tile msg stats
    h, st0 = linear_relu(x, params["fc_w"], params["fc_b"], tile_node)     # [Np, 128]

    # layers[0].conv only; layers[1:] = full DeepGCNLayer (res) fused into the kernel
    c1, st1 = genconv_layer(h, st0, adj_i8, counts, src_list, params["layers"][0],
                            res=False, tile_dst=tile_dst, tile_src=tile_src, tile_node=tile_node)
    x2, st2 = genconv_layer(c1, st1, adj_i8, counts, src_list, params["layers"][1],
                            res=True, tile_dst=tile_dst, tile_src=tile_src, tile_node=tile_node)
    x3, _ = genconv_layer(x2, st2, adj_i8, counts, src_list, params["layers"][2],
                          res=True, tile_dst=tile_dst, tile_src=tile_src, tile_node=tile_node)

    # path_phi on the implicit concat [h | c1 | x2 | x3] (never materialized in HBM)
    hp = phi_fused(h, c1, x2, x3, params["phi_w"], params["phi_b"], tile_node)  # [Np, 512] bf16

    # gated attention + online-softmax pooling + path_rho + classifier (fused kernel)
    a_pad, logits3 = attention_head(hp, params, batch_size, m_pad, m_real)
    a_path = a_pad[:, :, :m_real]                                          # (B, 1, M)
    logits = logits3[:, 0, :]

    # tiny [B, 4] tail kept in plain JAX (glue)
    hazards = jax.nn.sigmoid(logits)
    surv = jnp.cumprod(1.0 - hazards, axis=-1)
    y_hat = jnp.argmax(logits, axis=-1, keepdims=True)
    return hazards, surv, y_hat, a_path, None


# ----------------------------- parameters ----------------------------------

def init_params(key, feat_dim=384, hidden_dim=128, n_classes=4):
    d4 = hidden_dim * 4
    keys = iter(jax.random.split(key, 16))

    def lin(k, fan_in, fan_out):
        kw, kb = jax.random.split(k)
        lim = 1.0 / jnp.sqrt(jnp.float32(fan_in))
        w = jax.random.uniform(kw, (fan_in, fan_out), jnp.float32, -lim, lim)
        b = jax.random.uniform(kb, (fan_out,), jnp.float32, -lim, lim)
        return w, b

    p = {}
    p["fc_w"], p["fc_b"] = lin(next(keys), feat_dim, hidden_dim)
    p["layers"] = []
    for _ in range(3):
        w1, b1 = lin(next(keys), hidden_dim, 2 * hidden_dim)
        w2, b2 = lin(next(keys), 2 * hidden_dim, hidden_dim)
        p["layers"].append(dict(
            t=jnp.ones((1, 1), jnp.float32),                 # learn_t init 1.0
            w1=w1, b1=b1,
            ln_g=jnp.ones((2 * hidden_dim,), jnp.float32),
            ln_b=jnp.zeros((2 * hidden_dim,), jnp.float32),
            w2=w2, b2=b2,
            norm_g=jnp.ones((hidden_dim,), jnp.float32),     # DeepGCNLayer LayerNorm
            norm_b=jnp.zeros((hidden_dim,), jnp.float32),
        ))
    p["phi_w"], p["phi_b"] = lin(next(keys), d4, d4)
    p["attn_a_w"], p["attn_a_b"] = lin(next(keys), d4, d4)
    p["attn_b_w"], p["attn_b_b"] = lin(next(keys), d4, d4)
    p["attn_c_w"], p["attn_c_b"] = lin(next(keys), d4, 1)
    p["rho_w"], p["rho_b"] = lin(next(keys), d4, d4)
    p["cls_w"], p["cls_b"] = lin(next(keys), d4, n_classes)
    return p


# ----------------------------- main -----------------------------------------

if __name__ == "__main__":
    key = jax.random.PRNGKey(0)
    kx, kp = jax.random.split(key)

    batch_size, nodes_per_graph, feat_dim = 2, 8, 384
    n_nodes = batch_size * nodes_per_graph

    x = jax.random.normal(kx, (n_nodes, feat_dim), jnp.float32)

    # block-diagonal bidirectional ring graphs (every node has incoming edges)
    mask = jnp.zeros((n_nodes, n_nodes), jnp.float32)
    for g in range(batch_size):
        for i in range(nodes_per_graph):
            s_idx = g * nodes_per_graph + i
            d_idx = g * nodes_per_graph + (i + 1) % nodes_per_graph
            mask = mask.at[d_idx, s_idx].set(1.0)
            mask = mask.at[s_idx, d_idx].set(1.0)

    params = init_params(kp, feat_dim=feat_dim, hidden_dim=128, n_classes=4)

    hazards, surv, y_hat, a_path, _ = patchgcn_forward(x, mask, params, batch_size)
    jax.block_until_ready((hazards, surv, y_hat, a_path))

    assert hazards.shape == (batch_size, 4)
    assert surv.shape == (batch_size, 4)
    assert y_hat.shape == (batch_size, 1)
    assert a_path.shape == (batch_size, 1, nodes_per_graph)
    assert bool(jnp.all(jnp.isfinite(hazards))) and bool(jnp.all(jnp.isfinite(a_path)))
    print("KERNEL_OK")
</pallas_src>

<mosaic_0001>
module attributes {stable_mosaic.version = 11 : i64} {
  func.func @_linear_relu_kernel(%arg0: i32, %arg1: memref<128x384xf32, #tpu.memory_space<vmem>>, %arg2: memref<384x128xbf16, #tpu.memory_space<vmem>>, %arg3: memref<1x128xf32, #tpu.memory_space<vmem>>, %arg4: memref<128x128xf32, #tpu.memory_space<vmem>>, %arg5: memref<1x2x128xf32, #tpu.memory_space<vmem>>) attributes {dimension_semantics = [#tpu.dimension_semantics<parallel>], iteration_bounds = array<i64: 2>, scalar_prefetch = 0 : i64, scratch_operands = 0 : i64, tpu.core_type = #tpu.core_type<tc>, window_params = [{transform_indices = @transform_0, window_bounds = array<i64: 128, 384>}, {pipeline_mode = #tpu.pipeline_mode<synchronous>, transform_indices = @transform_1, window_bounds = array<i64: 384, 128>}, {pipeline_mode = #tpu.pipeline_mode<synchronous>, transform_indices = @transform_2, window_bounds = array<i64: 1, 128>}, {transform_indices = @transform_3, window_bounds = array<i64: 128, 128>}, {transform_indices = @transform_4, window_bounds = array<i64: 1, 2, 128>}]} {
    %c0 = arith.constant 0 : index
    %c0_0 = arith.constant 0 : index
    %0 = vector.load %arg1[%c0, %c0_0] : memref<128x384xf32, #tpu.memory_space<vmem>>, vector<128x384xf32>
    %1 = arith.truncf %0 : vector<128x384xf32> to vector<128x384xbf16>
    %c0_1 = arith.constant 0 : index
    %c0_2 = arith.constant 0 : index
    %2 = vector.load %arg2[%c0_1, %c0_2] : memref<384x128xbf16, #tpu.memory_space<vmem>>, vector<384x128xbf16>
    %cst = arith.constant dense<0.000000e+00> : vector<128x128xf32>
    %3 = tpu.matmul %1, %2, %cst {dimension_numbers = #tpu.dot_dimension_numbers<[1], [0], [0], [1], [0, 0, 1, 1], [], []>} : vector<128x384xbf16>, vector<384x128xbf16>, vector<128x128xf32> -> vector<128x128xf32>
    %c0_3 = arith.constant 0 : index
    %c0_4 = arith.constant 0 : index
    %4 = vector.load %arg3[%c0_3, %c0_4] : memref<1x128xf32, #tpu.memory_space<vmem>>, vector<1x128xf32>
    %5 = vector.broadcast %4 : vector<1x128xf32> to vector<128x128xf32>
    %6 = arith.addf %3, %5 : vector<128x128xf32>
    %cst_5 = arith.constant 0.000000e+00 : f32
    %7 = vector.broadcast %cst_5 : f32 to vector<128x128xf32>
    %8 = arith.maximumf %6, %7 : vector<128x128xf32>
    %c0_6 = arith.constant 0 : index
    %c0_7 = arith.constant 0 : index
    %9 = vector.load %arg4[%c0_6, %c0_7] : memref<128x128xf32, #tpu.memory_space<vmem>>, vector<128x128xf32>
    tpu.vector_store %arg4[%c0_6, %c0_7], %8 {strides = array<i32>} : memref<128x128xf32, #tpu.memory_space<vmem>>, vector<128x128xf32>,
    %cst_8 = arith.constant 1.000000e-07 : f32
    %10 = vector.broadcast %cst_8 : f32 to vector<128x128xf32>
    %11 = arith.addf %8, %10 : vector<128x128xf32>
    %cst_9 = arith.constant dense<0xFF800000> : vector<128xf32>
    %12 = vector.multi_reduction <maximumf>, %11, %cst_9 [0] : vector<128x128xf32> to vector<128xf32>
    %13 = vector.shape_cast %12 : vector<128xf32> to vector<1x128xf32>
    %cst_10 = arith.constant dense<0x7F800000> : vector<128xf32>
    %14 = vector.multi_reduction <minimumf>, %11, %cst_10 [0] : vector<128x128xf32> to vector<128xf32>
    %15 = vector.shape_cast %14 : vector<128xf32> to vector<1x128xf32>
    %16 = tpu.concatenate %13, %15 in 0 : vector<1x128xf32>, vector<1x128xf32> -> vector<2x128xf32>
    %c0_11 = arith.constant 0 : index
    %c0_12 = arith.constant 0 : index
    %c0_13 = arith.constant 0 : index
    %17 = vector.load %arg5[%c0_11, %c0_12, %c0_13] : memref<1x2x128xf32, #tpu.memory_space<vmem>>, vector<1x2x128xf32>
    %18 = vector.shape_cast %17 : vector<1x2x128xf32> to vector<2x128xf32>
    %19 = vector.shape_cast %16 : vector<2x128xf32> to vector<1x2x128xf32>
    tpu.vector_store %arg5[%c0_11, %c0_12, %c0_13], %19 {strides = array<i32>} : memref<1x2x128xf32, #tpu.memory_space<vmem>>, vector<1x2x128xf32>,
    return
  }
  func.func @transform_0(%arg0: i32) -> (i32, i32) {
    %c0_i32 = arith.constant 0 : i32
    %c0_i32_0 = arith.constant 0 : i32
    return %arg0, %c0_i32 : i32, i32
  }
  func.func @transform_1(%arg0: i32) -> (i32, i32) {
    %c0_i32 = arith.constant 0 : i32
    %c0_i32_0 = arith.constant 0 : i32
    %c0_i32_1 = arith.constant 0 : i32
    return %c0_i32, %c0_i32_0 : i32, i32
  }
  func.func @transform_2(%arg0: i32) -> (i32, i32) {
    %c0_i32 = arith.constant 0 : i32
    %c0_i32_0 = arith.constant 0 : i32
    %c0_i32_1 = arith.constant 0 : i32
    return %c0_i32, %c0_i32_0 : i32, i32
  }
  func.func @transform_3(%arg0: i32) -> (i32, i32) {
    %c0_i32 = arith.constant 0 : i32
    %c0_i32_0 = arith.constant 0 : i32
    return %arg0, %c0_i32 : i32, i32
  }
  func.func @transform_4(%arg0: i32) -> (i32, i32, i32) {
    %c0_i32 = arith.constant 0 : i32
    %c0_i32_0 = arith.constant 0 : i32
    %c0_i32_1 = arith.constant 0 : i32
    return %arg0, %c0_i32, %c0_i32_0 : i32, i32, i32
  }
}

</mosaic_0001>

<llo_original>
// kernel: tpu_custom_call.1
$region0: #{tpu_custom_call.1}
  #allocation0 [shape = 'u32[]', space=smem, size = 0x4, offset = 0x4, fixed_abs, tag = 'smem constant byte address 0x4 - core index']
  #allocation1 [shape = 'u32[144,128]{1,0:T(1,128)}', space=vmem, size = 0x12000, scoped, tag = 'internal scratch']
  %s0 = inlined_call_operand.hbm [shape: f32[256,384], index: 0, kind: input, shape index: {}]
  %s1 = inlined_call_operand.hbm [shape: bf16[384,128], index: 1, kind: input, shape index: {}]
  %s2 = inlined_call_operand.vmem [shape: f32[1,128], index: 2, kind: input, shape index: {}]
  %s3 = inlined_call_operand.hbm [shape: f32[256,128], index: 3, kind: output, shape index: {0}]
  %s4 = inlined_call_operand.hbm [shape: f32[2,2,128], index: 4, kind: output, shape index: {1}]
  %5 = xla_tuple %s3, %s4
  %s6 = sld [smem:[#allocation0]]
  $region61: #{tpu_custom_call.1} parent=0
    _
  %s8 = ssub.s32 1, %s6
  %s9 = scalar_select 0, %s8, %s6
  $region1: #{tpu_custom_call.1} parent=0
    #allocation2 [shape = 'u8[393216]{0}', space=vmem, size = 0x60000, scoped, tag = 'input window, operand 0']
    #allocation3 [shape = 's32[2]{0}', space=sflag, size = 0x8, scoped, tag = 'scoped memory for tpu_custom_call.1']
    #allocation4 [shape = 's32[2]{0}', space=sflag, size = 0x8, scoped, tag = 'scoped memory for tpu_custom_call.1']
    #allocation5 [shape = 'u8[98304]{0}', space=vmem, size = 0x18000, scoped, tag = 'input window, operand 1, single buffered']
    #allocation6 [shape = 's32[1]{0}', space=sflag, size = 0x4, scoped, tag = 'scoped memory for tpu_custom_call.1']
    #allocation7 [shape = 'u8[131072]{0}', space=vmem, size = 0x20000, scoped, tag = 'output window, operand 0']
    #allocation8 [shape = 'u8[2048]{0}', space=vmem, size = 0x800, scoped, tag = 'output window, operand 1']
    #allocation9 [shape = 's32[2]{0}', space=sflag, size = 0x8, scoped, tag = 'scoped memory for tpu_custom_call.1']
    %10 = vsyncpa [#allocation3], 0
    %s11 = scalar_lea.sflag [#allocation3], 1
    %12 = vsyncpa %s11, 0
    %13 = vsyncpa [#allocation6], 0
    %14 = vsyncpa [#allocation4], 0
    %s15 = scalar_lea.sflag [#allocation4], 1
    %16 = vsyncpa %s15, 0
    %17 = vsyncpa [#allocation9], 0
    %s18 = scalar_lea.sflag [#allocation9], 1
    %19 = vsyncpa %s18, 0
    loop: start=0, step=1, limit=4
    $region2: #{tpu_custom_call.1} parent=1 // loop_pre_header
      _
    $region3: #{tpu_custom_call.1} parent=1 // loop_header
      %s21 = sphi 0, %s25
      %p22 = scmp.ge.s32.totalorder %s21, 4
      %s31 = sphi 0, %s33
      %s34 = sphi 0, %s31
      %s35 = sphi 0, %s34
      %s51 = sphi 0, %s35
      %s55 = sphi 0, %s55
      %s57 = sphi 0, %s55
      %s58 = sphi 0, %s57
      %s72 = sphi 0, %s58
      %s76 = sphi 0, %s76
      %s78 = sphi 0, %s76
      %s79 = sphi 0, %s78
      %s93 = sphi 0, %s79
      %s99 = sphi 0, %s101
      %s102 = sphi 0, %s99
      %s103 = sphi 0, %s102
      %s119 = sphi 0, %s103
      %s125 = sphi 0, %s127
      %s128 = sphi 0, %s125
      %s129 = sphi 0, %s128
      %s145 = sphi 0, %s129
    $region4: #{tpu_custom_call.1} parent=1 // loop_header_branch
      %24 = sbr.rel (%p22) target = $region8
    $region5: #{tpu_custom_call.1} parent=1 // loop_body
      %s26 = ssub.s32 %s21, 1
      %s27 = ssub.s32 %s21, 2
      %s28 = sadd.s32 %s21, 1
      %s29 = ssub.s32 %s21, %s28
      %p30 = scmp.eq.s32.totalorder %s29, 0
      %s32 = sadd.s32 %s31, 1
      %s33 = scalar_select %p30, %s31, %s32
      %p36 = pneg %p30
      %p37 = scmp.eq.s32.totalorder %s21, 1
      %p38 = por %p36, %p37
      %p39 = scmp.ne.s32.totalorder %s31, %s34
      %p40 = scmp.eq.s32.totalorder %s21, 0
      %p41 = por %p39, %p40
      %p42 = scmp.ne.s32.totalorder %s31, %s34
      %p43 = scmp.eq.s32.totalorder %s26, 1
      %p44 = por %p42, %p43
      %p45 = scmp.ne.s32.totalorder %s34, %s35
      %p46 = scmp.eq.s32.totalorder %s26, 0
      %p47 = por %p45, %p46
      %p48 = scmp.ne.s32.totalorder %s34, %s35
      %p49 = scmp.eq.s32.totalorder %s27, 1
      %p50 = por %p48, %p49
      %p52 = scmp.ne.s32.totalorder %s35, %s51
      %p53 = scmp.eq.s32.totalorder %s27, 0
      %p54 = por %p52, %p53
      %s56 = sadd.s32 %s55, 1
      %p59 = scmp.eq.s32.totalorder %s21, 1
      %p60 = scmp.ne.s32.totalorder %s55, %s57
      %p61 = scmp.eq.s32.totalorder %s21, 0
      %p62 = por %p60, %p61
      %p63 = scmp.ne.s32.totalorder %s55, %s57
      %p64 = scmp.eq.s32.totalorder %s26, 1
      %p65 = por %p63, %p64
      %p66 = scmp.ne.s32.totalorder %s57, %s58
      %p67 = scmp.eq.s32.totalorder %s26, 0
      %p68 = por %p66, %p67
      %p69 = scmp.ne.s32.totalorder %s57, %s58
      %p70 = scmp.eq.s32.totalorder %s27, 1
      %p71 = por %p69, %p70
      %p73 = scmp.ne.s32.totalorder %s58, %s72
      %p74 = scmp.eq.s32.totalorder %s27, 0
      %p75 = por %p73, %p74
      %s77 = sadd.s32 %s76, 1
      %p80 = scmp.eq.s32.totalorder %s21, 1
      %p81 = scmp.ne.s32.totalorder %s76, %s78
      %p82 = scmp.eq.s32.totalorder %s21, 0
      %p83 = por %p81, %p82
      %p84 = scmp.ne.s32.totalorder %s76, %s78
      %p85 = scmp.eq.s32.totalorder %s26, 1
      %p86 = por %p84, %p85
      %p87 = scmp.ne.s32.totalorder %s78, %s79
      %p88 = scmp.eq.s32.totalorder %s26, 0
      %p89 = por %p87, %p88
      %p90 = scmp.ne.s32.totalorder %s78, %s79
      %p91 = scmp.eq.s32.totalorder %s27, 1
      %p92 = por %p90, %p91
      %p94 = scmp.ne.s32.totalorder %s79, %s93
      %p95 = scmp.eq.s32.totalorder %s27, 0
      %p96 = por %p94, %p95
      %s97 = ssub.s32 %s21, %s28
      %p98 = scmp.eq.s32.totalorder %s97, 0
      %s100 = sadd.s32 %s99, 1
      %s101 = scalar_select %p98, %s99, %s100
      %p104 = pneg %p98
      %p105 = scmp.eq.s32.totalorder %s21, 1
      %p106 = por %p104, %p105
      %p107 = scmp.ne.s32.totalorder %s99, %s102
      %p108 = scmp.eq.s32.totalorder %s21, 0
      %p109 = por %p107, %p108
      %p110 = scmp.ne.s32.totalorder %s99, %s102
      %p111 = scmp.eq.s32.totalorder %s26, 1
      %p112 = por %p110, %p111
      %p113 = scmp.ne.s32.totalorder %s102, %s103
      %p114 = scmp.eq.s32.totalorder %s26, 0
      %p115 = por %p113, %p114
      %p116 = scmp.ne.s32.totalorder %s102, %s103
      %p117 = scmp.eq.s32.totalorder %s27, 1
      %p118 = por %p116, %p117
      %p120 = scmp.ne.s32.totalorder %s103, %s119
      %p121 = scmp.eq.s32.totalorder %s27, 0
      %p122 = por %p120, %p121
      %s123 = ssub.s32 %s21, %s28
      %p124 = scmp.eq.s32.totalorder %s123, 0
      %s126 = sadd.s32 %s125, 1
      %s127 = scalar_select %p124, %s125, %s126
      %p130 = pneg %p124
      %p131 = scmp.eq.s32.totalorder %s21, 1
      %p132 = por %p130, %p131
      %p133 = scmp.ne.s32.totalorder %s125, %s128
      %p134 = scmp.eq.s32.totalorder %s21, 0
      %p135 = por %p133, %p134
      %p136 = scmp.ne.s32.totalorder %s125, %s128
      %p137 = scmp.eq.s32.totalorder %s26, 1
      %p138 = por %p136, %p137
      %p139 = scmp.ne.s32.totalorder %s128, %s129
      %p140 = scmp.eq.s32.totalorder %s26, 0
      %p141 = por %p139, %p140
      %p142 = scmp.ne.s32.totalorder %s128, %s129
      %p143 = scmp.eq.s32.totalorder %s27, 1
      %p144 = por %p142, %p143
      %p146 = scmp.ne.s32.totalorder %s129, %s145
      %p147 = scmp.eq.s32.totalorder %s27, 0
      %p148 = por %p146, %p147
      %p149 = scmp.le.s32.totalorder 1, %s21
      %p150 = scmp.lt.s32.totalorder %s21, 3
      %p151 = pnand %p149, %p150
      %p152 = pneg %p151
      // Predicated region
      $region9: #{tpu_custom_call.1} parent=5 // pred_check
        _
      $region10: #{tpu_custom_call.1} parent=5 // pred_check_branch
        %154 = sbr.rel (%p151) target = $region12
      $region11: #{tpu_custom_call.1} parent=5 // pred_region
        %s155 = ssub.s32 %s21, 1
        // Predicated region
        $region13: #{tpu_custom_call.1} parent=11 // pred_check
          %p156 = pneg %p68
        $region14: #{tpu_custom_call.1} parent=11 // pred_check_branch
          %158 = sbr.rel (%p156) target = $region16
        $region15: #{tpu_custom_call.1} parent=11 // pred_region
          %s160 = ssub.s32 3072, 3072
          %161 = vsyncadd [#allocation6], %s160
          %s162 = sshll.u32 [#allocation5], 4
          %s163 = int_to_ptr.vmem [resolvable:$true] %s162
          %168 = dma.hbm_to_vmem [thread:$0]  %s1, 3072, %s163, [#allocation6], 64, 64, 4
        $region16: #{tpu_custom_call.1} parent=11 // pred_fallthru
          _
        // Predicated region
        $region17: #{tpu_custom_call.1} parent=11 // pred_check
          %p169 = pneg %p89
        $region18: #{tpu_custom_call.1} parent=11 // pred_check_branch
          %171 = sbr.rel (%p169) target = $region20
        $region19: #{tpu_custom_call.1} parent=11 // pred_region
          _
        $region20: #{tpu_custom_call.1} parent=11 // pred_fallthru
          _
      $region12: #{tpu_custom_call.1} parent=5 // pred_fallthru
        _
      %p172 = scmp.lt.s32.totalorder %s21, 2
      // Predicated region
      $region21: #{tpu_custom_call.1} parent=5 // pred_check
        %p173 = pneg %p172
      $region22: #{tpu_custom_call.1} parent=5 // pred_check_branch
        %175 = sbr.rel (%p173) target = $region24
      $region23: #{tpu_custom_call.1} parent=5 // pred_region
        // Predicated region
        $region25: #{tpu_custom_call.1} parent=23 // pred_check
          %p176 = pneg %p41
        $region26: #{tpu_custom_call.1} parent=23 // pred_check_branch
          %178 = sbr.rel (%p176) target = $region28
        $region27: #{tpu_custom_call.1} parent=23 // pred_region
          %s179 = sand.u32 %s31, 1
          %s180 = scalar_lea.sflag [#allocation3], %s179
          %s181 = sand.u32 %s31, 1
          %s182 = smul.addr %s181, 384
          %s183 = scalar_lea.vmem [#allocation2], %s182
          %s184 = smul.u32 16, %s21
          %s186 = ssub.s32 6144, 6144
          %187 = vsyncadd %s180, %s186
          %s188 = smul.addr %s184, 3
          %s189 = smul.addr %s188, 128
          %s190 = scalar_lea.hbm %s0, %s189
          %s191 = sshll.u32 %s183, 4
          %s192 = int_to_ptr.vmem [resolvable:$true] %s191
          %197 = dma.hbm_to_vmem [thread:$0]  %s190, 6144, %s192, %s180, 384, 384, 24
        $region28: #{tpu_custom_call.1} parent=23 // pred_fallthru
          _
      $region24: #{tpu_custom_call.1} parent=5 // pred_fallthru
        _
      %p198 = scmp.le.s32.totalorder 1, %s21
      %p199 = scmp.lt.s32.totalorder %s21, 3
      %p200 = pnand %p198, %p199
      %p201 = pneg %p200
      // Predicated region
      $region29: #{tpu_custom_call.1} parent=5 // pred_check
        _
      $region30: #{tpu_custom_call.1} parent=5 // pred_check_branch
        %203 = sbr.rel (%p200) target = $region32
      $region31: #{tpu_custom_call.1} parent=5 // pred_region
        %s204 = ssub.s32 %s21, 1
        %s205 = sand.u32 %s34, 1
        %s206 = scalar_lea.sflag [#allocation3], %s205
        %s207 = sand.u32 %s34, 1
        %s208 = smul.addr %s207, 384
        %s209 = scalar_lea.vmem [#allocation2], %s208
        // Predicated region
        $region33: #{tpu_custom_call.1} parent=31 // pred_check
          %p210 = pneg %p47
        $region34: #{tpu_custom_call.1} parent=31 // pred_check_branch
          %212 = sbr.rel (%p210) target = $region36
        $region35: #{tpu_custom_call.1} parent=31 // pred_region
          %213 = dma.done %s206, 6144
        $region36: #{tpu_custom_call.1} parent=31 // pred_fallthru
          _
        // Predicated region
        $region37: #{tpu_custom_call.1} parent=31 // pred_check
          %p214 = pneg %p68
        $region38: #{tpu_custom_call.1} parent=31 // pred_check_branch
          %216 = sbr.rel (%p214) target = $region40
        $region39: #{tpu_custom_call.1} parent=31 // pred_region
          %217 = dma.done [#allocation6], 3072
        $region40: #{tpu_custom_call.1} parent=31 // pred_fallthru
          _
        %s218 = sand.u32 %s34, 1
        %s219 = scalar_lea.sflag [#allocation3], %s218
        %s220 = sand.u32 %s34, 1
        %s221 = smul.addr %s220, 384
        %s222 = scalar_lea.vmem [#allocation2], %s221
        %p223 = pneg %p47
        %p224 = pneg %p44
        %p225 = pneg %p68
        %p226 = pneg %p65
        %p227 = pneg %p89
        %p228 = pneg %p86
        %p229 = pneg %p115
        %p230 = pneg %p112
        %s231 = sand.u32 %s102, 1
        %s232 = scalar_lea.sflag [#allocation4], %s231
        %s233 = sand.u32 %s102, 1
        %s234 = smul.addr %s233, 128
        %s235 = scalar_lea.vmem [#allocation7], %s234
        %p236 = pneg %p141
        %p237 = pneg %p138
        %s238 = sand.u32 %s128, 1
        %s239 = scalar_lea.sflag [#allocation9], %s238
        %s240 = sand.u32 %s128, 1
        %s241 = smul.addr %s240, 2
        %s242 = scalar_lea.vmem [#allocation8], %s241
        %s243 = smul.u32 16, %s26
        %s244 = smul.u32 16, %s26
        %v246 = vld [vmem:[%s209] sm:$0xff]
        %v247 = vld [vmem:[%s209 + $0x8] sm:$0xff]
        %v248 = vld [vmem:[%s209 + $0x10] sm:$0xff]
        %v249 = vld [vmem:[%s209 + $0x18] sm:$0xff]
        %v250 = vld [vmem:[%s209 + $0x20] sm:$0xff]
        %v251 = vld [vmem:[%s209 + $0x28] sm:$0xff]
        %v252 = vld [vmem:[%s209 + $0x30] sm:$0xff]
        %v253 = vld [vmem:[%s209 + $0x38] sm:$0xff]
        %v254 = vld [vmem:[%s209 + $0x40] sm:$0xff]
        %v255 = vld [vmem:[%s209 + $0x48] sm:$0xff]
        %v256 = vld [vmem:[%s209 + $0x50] sm:$0xff]
        %v257 = vld [vmem:[%s209 + $0x58] sm:$0xff]
        %v258 = vld [vmem:[%s209 + $0x60] sm:$0xff]
        %v259 = vld [vmem:[%s209 + $0x68] sm:$0xff]
        %v260 = vld [vmem:[%s209 + $0x70] sm:$0xff]
        %v261 = vld [vmem:[%s209 + $0x78] sm:$0xff]
        %v262 = vld [vmem:[%s209 + $0x80] sm:$0xff]
        %v263 = vld [vmem:[%s209 + $0x88] sm:$0xff]
        %v264 = vld [vmem:[%s209 + $0x90] sm:$0xff]
        %v265 = vld [vmem:[%s209 + $0x98] sm:$0xff]
        %v266 = vld [vmem:[%s209 + $0xa0] sm:$0xff]
        %v267 = vld [vmem:[%s209 + $0xa8] sm:$0xff]
        %v268 = vld [vmem:[%s209 + $0xb0] sm:$0xff]
        %v269 = vld [vmem:[%s209 + $0xb8] sm:$0xff]
        %v270 = vld [vmem:[%s209 + $0xc0] sm:$0xff]
        %v271 = vld [vmem:[%s209 + $0xc8] sm:$0xff]
        %v272 = vld [vmem:[%s209 + $0xd0] sm:$0xff]
        %v273 = vld [vmem:[%s209 + $0xd8] sm:$0xff]
        %v274 = vld [vmem:[%s209 + $0xe0] sm:$0xff]
        %v275 = vld [vmem:[%s209 + $0xe8] sm:$0xff]
        %v276 = vld [vmem:[%s209 + $0xf0] sm:$0xff]
        %v277 = vld [vmem:[%s209 + $0xf8] sm:$0xff]
        %v278 = vld [vmem:[%s209 + $0x100] sm:$0xff]
        %v279 = vld [vmem:[%s209 + $0x108] sm:$0xff]
        %v280 = vld [vmem:[%s209 + $0x110] sm:$0xff]
        %v281 = vld [vmem:[%s209 + $0x118] sm:$0xff]
        %v282 = vld [vmem:[%s209 + $0x120] sm:$0xff]
        %v283 = vld [vmem:[%s209 + $0x128] sm:$0xff]
        %v284 = vld [vmem:[%s209 + $0x130] sm:$0xff]
        %v285 = vld [vmem:[%s209 + $0x138] sm:$0xff]
        %v286 = vld [vmem:[%s209 + $0x140] sm:$0xff]
        %v287 = vld [vmem:[%s209 + $0x148] sm:$0xff]
        %v288 = vld [vmem:[%s209 + $0x150] sm:$0xff]
        %v289 = vld [vmem:[%s209 + $0x158] sm:$0xff]
        %v290 = vld [vmem:[%s209 + $0x160] sm:$0xff]
        %v291 = vld [vmem:[%s209 + $0x168] sm:$0xff]
        %v292 = vld [vmem:[%s209 + $0x170] sm:$0xff]
        %v293 = vld [vmem:[%s209 + $0x178] sm:$0xff]
        %v294 = vpack.c.bf16 %v249, %v246
        %v295 = vpack.c.bf16 %v250, %v247
        %v296 = vpack.c.bf16 %v251, %v248
        %v297 = vpack.c.bf16 %v255, %v252
        %v298 = vpack.c.bf16 %v256, %v253
        %v299 = vpack.c.bf16 %v257, %v254
        %v300 = vpack.c.bf16 %v261, %v258
        %v301 = vpack.c.bf16 %v262, %v259
        %v302 = vpack.c.bf16 %v263, %v260
        %v303 = vpack.c.bf16 %v267, %v264
        %v304 = vpack.c.bf16 %v268, %v265
        %v305 = vpack.c.bf16 %v269, %v266
        %v306 = vpack.c.bf16 %v273, %v270
        %v307 = vpack.c.bf16 %v274, %v271
        %v308 = vpack.c.bf16 %v275, %v272
        %v309 = vpack.c.bf16 %v279, %v276
        %v310 = vpack.c.bf16 %v280, %v277
        %v311 = vpack.c.bf16 %v281, %v278
        %v312 = vpack.c.bf16 %v285, %v282
        %v313 = vpack.c.bf16 %v286, %v283
        %v314 = vpack.c.bf16 %v287, %v284
        %v315 = vpack.c.bf16 %v291, %v288
        %v316 = vpack.c.bf16 %v292, %v289
        %v317 = vpack.c.bf16 %v293, %v290
        %v318 = vld [vmem:[#allocation5] sm:$0xf]
        %v319 = vld [vmem:[#allocation5 + $0x4] sm:$0xf]
        %v320 = vld [vmem:[#allocation5 + $0x8] sm:$0xf]
        %v321 = vld [vmem:[#allocation5 + $0xc] sm:$0xf]
        %v322 = vld [vmem:[#allocation5 + $0x10] sm:$0xf]
        %v323 = vld [vmem:[#allocation5 + $0x14] sm:$0xf]
        %v324 = vld [vmem:[#allocation5 + $0x18] sm:$0xf]
        %v325 = vld [vmem:[#allocation5 + $0x1c] sm:$0xf]
        %v326 = vld [vmem:[#allocation5 + $0x20] sm:$0xf]
        %v327 = vld [vmem:[#allocation5 + $0x24] sm:$0xf]
        %v328 = vld [vmem:[#allocation5 + $0x28] sm:$0xf]
        %v329 = vld [vmem:[#allocation5 + $0x2c] sm:$0xf]
        %v330 = vld [vmem:[#allocation5 + $0x30] sm:$0xf]
        %v331 = vld [vmem:[#allocation5 + $0x34] sm:$0xf]
        %v332 = vld [vmem:[#allocation5 + $0x38] sm:$0xf]
        %v333 = vld [vmem:[#allocation5 + $0x3c] sm:$0xf]
        %v334 = vld [vmem:[#allocation5 + $0x40] sm:$0xf]
        %v335 = vld [vmem:[#allocation5 + $0x44] sm:$0xf]
        %v336 = vld [vmem:[#allocation5 + $0x48] sm:$0xf]
        %v337 = vld [vmem:[#allocation5 + $0x4c] sm:$0xf]
        %v338 = vld [vmem:[#allocation5 + $0x50] sm:$0xf]
        %v339 = vld [vmem:[#allocation5 + $0x54] sm:$0xf]
        %v340 = vld [vmem:[#allocation5 + $0x58] sm:$0xf]
        %v341 = vld [vmem:[#allocation5 + $0x5c] sm:$0xf]
        %v342 = vld [vmem:[#allocation5 + $0x60] sm:$0xf]
        %v343 = vld [vmem:[#allocation5 + $0x64] sm:$0xf]
        %v344 = vld [vmem:[#allocation5 + $0x68] sm:$0xf]
        %v345 = vld [vmem:[#allocation5 + $0x6c] sm:$0xf]
        %v346 = vld [vmem:[#allocation5 + $0x70] sm:$0xf]
        %v347 = vld [vmem:[#allocation5 + $0x74] sm:$0xf]
        %v348 = vld [vmem:[#allocation5 + $0x78] sm:$0xf]
        %v349 = vld [vmem:[#allocation5 + $0x7c] sm:$0xf]
        %v350 = vld [vmem:[#allocation5 + $0x80] sm:$0xf]
        %v351 = vld [vmem:[#allocation5 + $0x84] sm:$0xf]
        %v352 = vld [vmem:[#allocation5 + $0x88] sm:$0xf]
        %v353 = vld [vmem:[#allocation5 + $0x8c] sm:$0xf]
        %v354 = vld [vmem:[#allocation5 + $0x90] sm:$0xf]
        %v355 = vld [vmem:[#allocation5 + $0x94] sm:$0xf]
        %v356 = vld [vmem:[#allocation5 + $0x98] sm:$0xf]
        %v357 = vld [vmem:[#allocation5 + $0x9c] sm:$0xf]
        %v358 = vld [vmem:[#allocation5 + $0xa0] sm:$0xf]
        %v359 = vld [vmem:[#allocation5 + $0xa4] sm:$0xf]
        %v360 = vld [vmem:[#allocation5 + $0xa8] sm:$0xf]
        %v361 = vld [vmem:[#allocation5 + $0xac] sm:$0xf]
        %v362 = vld [vmem:[#allocation5 + $0xb0] sm:$0xf]
        %v363 = vld [vmem:[#allocation5 + $0xb4] sm:$0xf]
        %v364 = vld [vmem:[#allocation5 + $0xb8] sm:$0xf]
        %v365 = vld [vmem:[#allocation5 + $0xbc] sm:$0xf]
        %v366 = vld [vmem:[%s2] sm:$0x1]
        %v368 = vlaneseq
        %v369 = vshrl.u32 %v368, 7
        %v370 = vsub.s32 0, %v369
        %v371 = vrot.slane %v366, %v370
        %v421 = vunpack.c.l.b16 %v318
        %v422 = vunpack.c.l.b16 %v319
        %v423 = vunpack.c.l.b16 %v320
        %v424 = vunpack.c.l.b16 %v321
        %v425 = vunpack.c.l.b16 %v322
        %v426 = vunpack.c.l.b16 %v323
        %v427 = vunpack.c.l.b16 %v324
        %v428 = vunpack.c.l.b16 %v325
        %v429 = vunpack.c.l.b16 %v326
        %v430 = vunpack.c.l.b16 %v327
        %v431 = vunpack.c.l.b16 %v328
        %v432 = vunpack.c.l.b16 %v329
        %v433 = vunpack.c.l.b16 %v330
        %v434 = vunpack.c.l.b16 %v331
        %v435 = vunpack.c.l.b16 %v332
        %v436 = vunpack.c.l.b16 %v333
        %v437 = vunpack.c.l.b16 %v334
        %v438 = vunpack.c.l.b16 %v335
        %v439 = vunpack.c.l.b16 %v336
        %v440 = vunpack.c.l.b16 %v337
        %v441 = vunpack.c.l.b16 %v338
        %v442 = vunpack.c.l.b16 %v339
        %v443 = vunpack.c.l.b16 %v340
        %v444 = vunpack.c.l.b16 %v341
        %v445 = vunpack.c.l.b16 %v342
        %v446 = vunpack.c.l.b16 %v343
        %v447 = vunpack.c.l.b16 %v344
        %v448 = vunpack.c.l.b16 %v345
        %v449 = vunpack.c.l.b16 %v346
        %v450 = vunpack.c.l.b16 %v347
        %v451 = vunpack.c.l.b16 %v348
        %v452 = vunpack.c.l.b16 %v349
        %v453 = vunpack.c.l.b16 %v350
        %v454 = vunpack.c.l.b16 %v351
        %v455 = vunpack.c.l.b16 %v352
        %v456 = vunpack.c.l.b16 %v353
        %v457 = vunpack.c.l.b16 %v354
        %v458 = vunpack.c.l.b16 %v355
        %v459 = vunpack.c.l.b16 %v356
        %v460 = vunpack.c.l.b16 %v357
        %v461 = vunpack.c.l.b16 %v358
        %v462 = vunpack.c.l.b16 %v359
        %v463 = vunpack.c.l.b16 %v360
        %v464 = vunpack.c.l.b16 %v361
        %v465 = vunpack.c.l.b16 %v362
        %v466 = vunpack.c.l.b16 %v363
        %v467 = vunpack.c.l.b16 %v364
        %v468 = vunpack.c.l.b16 %v365
        %v469 = vpack.c.b16 %v422, %v421
        %v470 = vpack.c.b16 %v424, %v423
        %v471 = vpack.c.b16 %v426, %v425
        %v472 = vpack.c.b16 %v428, %v427
        %v473 = vpack.c.b16 %v430, %v429
        %v474 = vpack.c.b16 %v432, %v431
        %v475 = vpack.c.b16 %v434, %v433
        %v476 = vpack.c.b16 %v436, %v435
        %v477 = vpack.c.b16 %v438, %v437
        %v478 = vpack.c.b16 %v440, %v439
        %v479 = vpack.c.b16 %v442, %v441
        %v480 = vpack.c.b16 %v444, %v443
        %v481 = vpack.c.b16 %v446, %v445
        %v482 = vpack.c.b16 %v448, %v447
        %v483 = vpack.c.b16 %v450, %v449
        %v484 = vpack.c.b16 %v452, %v451
        %v485 = vpack.c.b16 %v454, %v453
        %v486 = vpack.c.b16 %v456, %v455
        %v487 = vpack.c.b16 %v458, %v457
        %v488 = vpack.c.b16 %v460, %v459
        %v489 = vpack.c.b16 %v462, %v461
        %v490 = vpack.c.b16 %v464, %v463
        %v491 = vpack.c.b16 %v466, %v465
        %v492 = vpack.c.b16 %v468, %v467
        %517 = vmatprep.subr.bf16.mxu0 0
        %518 = vmatpush1.bf16.msra.mxu0 %v469
        %519 = vmatprep.subr.bf16.mxu0 0
        %520 = vmatpush1.bf16.msra.mxu0 %v470
        %521 = vmatprep.subr.bf16.mxu0 0
        %522 = vmatpush1.bf16.msra.mxu0 %v471
        %523 = vmatprep.subr.bf16.mxu0 0
        %524 = vmatpush1.bf16.msra.mxu0 %v472
        %525 = vmatprep.subr.bf16.mxu0 0
        %526 = vmatpush1.bf16.msra.mxu0 %v473
        %527 = vmatprep.subr.bf16.mxu0 0
        %528 = vmatpush1.bf16.msra.mxu0 %v474
        %529 = vmatprep.subr.bf16.mxu0 0
        %530 = vmatpush1.bf16.msra.mxu0 %v475
        %531 = vmatprep.subr.bf16.mxu0 0
        %532 = vmatpush1.bf16.msra.mxu0 %v476
        %533 = vmatprep.subr.bf16.mxu0 0
        %534 = vmatpush1.bf16.msra.mxu0 %v477
        %535 = vmatprep.subr.bf16.mxu0 0
        %536 = vmatpush1.bf16.msra.mxu0 %v478
        %537 = vmatprep.subr.bf16.mxu0 0
        %538 = vmatpush1.bf16.msra.mxu0 %v479
        %539 = vmatprep.subr.bf16.mxu0 0
        %540 = vmatpush1.bf16.msra.mxu0 %v480
        %541 = vmatprep.subr.bf16.mxu0 0
        %542 = vmatpush1.bf16.msra.mxu0 %v481
        %543 = vmatprep.subr.bf16.mxu0 0
        %544 = vmatpush1.bf16.msra.mxu0 %v482
        %545 = vmatprep.subr.bf16.mxu0 0
        %546 = vmatpush1.bf16.msra.mxu0 %v483
        %547 = vmatprep.subr.bf16.mxu0 0
        %548 = vmatpush1.bf16.msra.mxu0 %v484
        %549 = vmatprep.mubr.bf16.mxu0 %v295
        %550 = vmatmul.mubr.bf16.gmra.mrb[0].mxu0 %v294
        %v551 = vpop.f32.mrb[0].mxu0
        %v552 = vadd.f32 %v371, %v551
        %v553 = vpop.f32.mrb[0].mxu0
        %v554 = vpop.f32.mrb[0].mxu0
        %v555 = vadd.f32 %v371, %v554
        %v556 = vpop.f32.mrb[0].mxu0
        %557 = vmatprep.mubr.bf16.mxu0 %v298
        %558 = vmatmul.mubr.bf16.gmra.mrb[0].mxu0 %v297
        %v559 = vpop.f32.mrb[0].mxu0
        %v560 = vadd.f32 %v371, %v559
        %v561 = vpop.f32.mrb[0].mxu0
        %v562 = vpop.f32.mrb[0].mxu0
        %v563 = vadd.f32 %v371, %v562
        %v564 = vpop.f32.mrb[0].mxu0
        %565 = vmatprep.mubr.bf16.mxu0 %v301
        %566 = vmatmul.mubr.bf16.gmra.mrb[0].mxu0 %v300
        %v567 = vpop.f32.mrb[0].mxu0
        %v568 = vadd.f32 %v371, %v567
        %v569 = vpop.f32.mrb[0].mxu0
        %v570 = vpop.f32.mrb[0].mxu0
        %v571 = vadd.f32 %v371, %v570
        %v572 = vpop.f32.mrb[0].mxu0
        %573 = vmatprep.mubr.bf16.mxu0 %v304
        %574 = vmatmul.mubr.bf16.gmra.mrb[0].mxu0 %v303
        %v575 = vpop.f32.mrb[0].mxu0
        %v576 = vadd.f32 %v371, %v575
        %v577 = vpop.f32.mrb[0].mxu0
        %v578 = vpop.f32.mrb[0].mxu0
        %v579 = vadd.f32 %v371, %v578
        %v580 = vpop.f32.mrb[0].mxu0
        %581 = vmatprep.mubr.bf16.mxu0 %v307
        %582 = vmatmul.mubr.bf16.gmra.mrb[0].mxu0 %v306
        %v583 = vpop.f32.mrb[0].mxu0
        %v584 = vadd.f32 %v371, %v583
        %v585 = vpop.f32.mrb[0].mxu0
        %v586 = vpop.f32.mrb[0].mxu0
        %v587 = vadd.f32 %v371, %v586
        %v588 = vpop.f32.mrb[0].mxu0
        %589 = vmatprep.mubr.bf16.mxu0 %v310
        %590 = vmatmul.mubr.bf16.gmra.mrb[0].mxu0 %v309
        %v591 = vpop.f32.mrb[0].mxu0
        %v592 = vadd.f32 %v371, %v591
        %v593 = vpop.f32.mrb[0].mxu0
        %v594 = vpop.f32.mrb[0].mxu0
        %v595 = vadd.f32 %v371, %v594
        %v596 = vpop.f32.mrb[0].mxu0
        %597 = vmatprep.mubr.bf16.mxu0 %v313
        %598 = vmatmul.mubr.bf16.gmra.mrb[0].mxu0 %v312
        %v599 = vpop.f32.mrb[0].mxu0
        %v600 = vadd.f32 %v371, %v599
        %v601 = vpop.f32.mrb[0].mxu0
        %v602 = vpop.f32.mrb[0].mxu0
        %v603 = vadd.f32 %v371, %v602
        %v604 = vpop.f32.mrb[0].mxu0
        %605 = vmatprep.mubr.bf16.mxu0 %v316
        %606 = vmatmul.mubr.bf16.gmra.mrb[0].mxu0 %v315
        %v607 = vpop.f32.mrb[0].mxu0
        %v608 = vadd.f32 %v371, %v607
        %v609 = vpop.f32.mrb[0].mxu0
        %v610 = vpop.f32.mrb[0].mxu0
        %v611 = vadd.f32 %v371, %v610
        %v612 = vpop.f32.mrb[0].mxu0
        %613 = vdwg.mxu0
        %614 = vmatprep.subr.bf16.mxu0 0
        %615 = vmatpush1.bf16.msra.mxu0 %v485
        %616 = vmatprep.subr.bf16.mxu0 0
        %617 = vmatpush1.bf16.msra.mxu0 %v486
        %618 = vmatprep.subr.bf16.mxu0 0
        %619 = vmatpush1.bf16.msra.mxu0 %v487
        %620 = vmatprep.subr.bf16.mxu0 0
        %621 = vmatpush1.bf16.msra.mxu0 %v488
        %622 = vmatprep.subr.bf16.mxu0 0
        %623 = vmatpush1.bf16.msra.mxu0 %v489
        %624 = vmatprep.subr.bf16.mxu0 0
        %625 = vmatpush1.bf16.msra.mxu0 %v490
        %626 = vmatprep.subr.bf16.mxu0 0
        %627 = vmatpush1.bf16.msra.mxu0 %v491
        %628 = vmatprep.subr.bf16.mxu0 0
        %629 = vmatpush1.bf16.msra.mxu0 %v492
        %630 = vmatprep.subr.bf16.mxu0 0
        %631 = vmatpush1.bf16.msra.mxu0 0
        %632 = vmatprep.subr.bf16.mxu0 0
        %633 = vmatpush1.bf16.msra.mxu0 0
        %634 = vmatprep.subr.bf16.mxu0 0
        %635 = vmatpush1.bf16.msra.mxu0 0
        %636 = vmatprep.subr.bf16.mxu0 0
        %637 = vmatpush1.bf16.msra.mxu0 0
        %638 = vmatprep.subr.bf16.mxu0 0
        %639 = vmatpush1.bf16.msra.mxu0 0
        %640 = vmatprep.subr.bf16.mxu0 0
        %641 = vmatpush1.bf16.msra.mxu0 0
        %642 = vmatprep.subr.bf16.mxu0 0
        %643 = vmatpush1.bf16.msra.mxu0 0
        %644 = vmatprep.subr.bf16.mxu0 0
        %645 = vmatpush1.bf16.msra.mxu0 0
        %646 = vmatprep.mubr.bf16.mxu0 0
        %647 = vmatmul.mubr.bf16.gmra.mrb[0].mxu0 %v296
        %v648 = vpop.f32.mrb[0].mxu0
        %v649 = vadd.f32 %v552, %v648
        %v650 = vpop.f32.mrb[0].mxu0
        %v651 = vpop.f32.mrb[0].mxu0
        %v652 = vadd.f32 %v555, %v651
        %v653 = vpop.f32.mrb[0].mxu0
        %654 = vmatprep.mubr.bf16.mxu0 0
        %655 = vmatmul.mubr.bf16.gmra.mrb[0].mxu0 %v299
        %v656 = vpop.f32.mrb[0].mxu0
        %v657 = vadd.f32 %v560, %v656
        %v658 = vpop.f32.mrb[0].mxu0
        %v659 = vpop.f32.mrb[0].mxu0
        %v660 = vadd.f32 %v563, %v659
        %v661 = vpop.f32.mrb[0].mxu0
        %662 = vmatprep.mubr.bf16.mxu0 0
        %663 = vmatmul.mubr.bf16.gmra.mrb[0].mxu0 %v302
        %v664 = vpop.f32.mrb[0].mxu0
        %v665 = vadd.f32 %v568, %v664
        %v666 = vpop.f32.mrb[0].mxu0
        %v667 = vpop.f32.mrb[0].mxu0
        %v668 = vadd.f32 %v571, %v667
        %v669 = vpop.f32.mrb[0].mxu0
        %670 = vmatprep.mubr.bf16.mxu0 0
        %671 = vmatmul.mubr.bf16.gmra.mrb[0].mxu0 %v305
        %v672 = vpop.f32.mrb[0].mxu0
        %v673 = vadd.f32 %v576, %v672
        %v674 = vpop.f32.mrb[0].mxu0
        %v675 = vpop.f32.mrb[0].mxu0
        %v676 = vadd.f32 %v579, %v675
        %v677 = vpop.f32.mrb[0].mxu0
        %678 = vmatprep.mubr.bf16.mxu0 0
        %679 = vmatmul.mubr.bf16.gmra.mrb[0].mxu0 %v308
        %v680 = vpop.f32.mrb[0].mxu0
        %v681 = vadd.f32 %v584, %v680
        %v682 = vpop.f32.mrb[0].mxu0
        %v683 = vpop.f32.mrb[0].mxu0
        %v684 = vadd.f32 %v587, %v683
        %v685 = vpop.f32.mrb[0].mxu0
        %686 = vmatprep.mubr.bf16.mxu0 0
        %687 = vmatmul.mubr.bf16.gmra.mrb[0].mxu0 %v311
        %v688 = vpop.f32.mrb[0].mxu0
        %v689 = vadd.f32 %v592, %v688
        %v690 = vpop.f32.mrb[0].mxu0
        %v691 = vpop.f32.mrb[0].mxu0
        %v692 = vadd.f32 %v595, %v691
        %v693 = vpop.f32.mrb[0].mxu0
        %694 = vmatprep.mubr.bf16.mxu0 0
        %695 = vmatmul.mubr.bf16.gmra.mrb[0].mxu0 %v314
        %v696 = vpop.f32.mrb[0].mxu0
        %v697 = vadd.f32 %v600, %v696
        %v698 = vpop.f32.mrb[0].mxu0
        %v699 = vpop.f32.mrb[0].mxu0
        %v700 = vadd.f32 %v603, %v699
        %v701 = vpop.f32.mrb[0].mxu0
        %702 = vmatprep.mubr.bf16.mxu0 0
        %703 = vmatmul.mubr.bf16.gmra.mrb[0].mxu0 %v317
        %v704 = vpop.f32.mrb[0].mxu0
        %v705 = vadd.f32 %v608, %v704
        %v706 = vpop.f32.mrb[0].mxu0
        %v707 = vpop.f32.mrb[0].mxu0
        %v708 = vadd.f32 %v611, %v707
        %v709 = vpop.f32.mrb[0].mxu0
        %710 = vdwg.mxu0
        %v711 = vmax.f32 %v649, 0.0
        %v712 = vmax.f32 %v652, 0.0
        %v713 = vmax.f32 %v657, 0.0
        %v714 = vmax.f32 %v660, 0.0
        %v715 = vmax.f32 %v665, 0.0
        %v716 = vmax.f32 %v668, 0.0
        %v717 = vmax.f32 %v673, 0.0
        %v718 = vmax.f32 %v676, 0.0
        %v719 = vmax.f32 %v681, 0.0
        %v720 = vmax.f32 %v684, 0.0
        %v721 = vmax.f32 %v689, 0.0
        %v722 = vmax.f32 %v692, 0.0
        %v723 = vmax.f32 %v697, 0.0
        %v724 = vmax.f32 %v700, 0.0
        %v725 = vmax.f32 %v705, 0.0
        %v726 = vmax.f32 %v708, 0.0
        %727 = vst [vmem:[%s235] sm:$0xff] %v711
        %728 = vst [vmem:[%s235 + $0x8] sm:$0xff] %v712
        %729 = vst [vmem:[%s235 + $0x10] sm:$0xff] %v713
        %730 = vst [vmem:[%s235 + $0x18] sm:$0xff] %v714
        %731 = vst [vmem:[%s235 + $0x20] sm:$0xff] %v715
        %732 = vst [vmem:[%s235 + $0x28] sm:$0xff] %v716
        %733 = vst [vmem:[%s235 + $0x30] sm:$0xff] %v717
        %734 = vst [vmem:[%s235 + $0x38] sm:$0xff] %v718
        %735 = vst [vmem:[%s235 + $0x40] sm:$0xff] %v719
        %736 = vst [vmem:[%s235 + $0x48] sm:$0xff] %v720
        %737 = vst [vmem:[%s235 + $0x50] sm:$0xff] %v721
        %738 = vst [vmem:[%s235 + $0x58] sm:$0xff] %v722
        %739 = vst [vmem:[%s235 + $0x60] sm:$0xff] %v723
        %740 = vst [vmem:[%s235 + $0x68] sm:$0xff] %v724
        %741 = vst [vmem:[%s235 + $0x70] sm:$0xff] %v725
        %742 = vst [vmem:[%s235 + $0x78] sm:$0xff] %v726
        %v743 = vadd.f32 %v711, 1e-07
        %v744 = vadd.f32 %v712, 1e-07
        %v745 = vadd.f32 %v713, 1e-07
        %v746 = vadd.f32 %v714, 1e-07
        %v747 = vadd.f32 %v715, 1e-07
        %v748 = vadd.f32 %v716, 1e-07
        %v749 = vadd.f32 %v717, 1e-07
        %v750 = vadd.f32 %v718, 1e-07
        %v751 = vadd.f32 %v719, 1e-07
        %v752 = vadd.f32 %v720, 1e-07
        %v753 = vadd.f32 %v721, 1e-07
        %v754 = vadd.f32 %v722, 1e-07
        %v755 = vadd.f32 %v723, 1e-07
        %v756 = vadd.f32 %v724, 1e-07
        %v757 = vadd.f32 %v725, 1e-07
        %v758 = vadd.f32 %v726, 1e-07
        %v759 = vmax.f32 %v743, %v747
        %v760 = vmax.f32 %v744, %v748
        %v761 = vmax.f32 %v745, %v749
        %v762 = vmax.f32 %v746, %v750
        %v763 = vmax.f32 %v759, %v751
        %v764 = vmax.f32 %v760, %v752
        %v765 = vmax.f32 %v761, %v753
        %v766 = vmax.f32 %v762, %v754
        %v767 = vmax.f32 %v763, %v755
        %v768 = vmax.f32 %v764, %v756
        %v769 = vmax.f32 %v765, %v757
        %v770 = vmax.f32 %v766, %v758
        %v771 = vmax.f32 %v767, %v768
        %v772 = vmax.f32 %v769, %v770
        %v773 = vmax.f32 %v771, %v772
        %v774 = vrot.slane %v773, 4
        %v775 = vmax.f32 %v773, %v774
        %v776 = vrot.slane %v775, 2
        %v777 = vmax.f32 %v775, %v776
        %v778 = vrot.slane %v777, 1
        %v779 = vmax.f32 %v777, %v778
        %v780 = vmin.f32 %v743, %v747
        %v781 = vmin.f32 %v744, %v748
        %v782 = vmin.f32 %v745, %v749
        %v783 = vmin.f32 %v746, %v750
        %v784 = vmin.f32 %v780, %v751
        %v785 = vmin.f32 %v781, %v752
        %v786 = vmin.f32 %v782, %v753
        %v787 = vmin.f32 %v783, %v754
        %v788 = vmin.f32 %v784, %v755
        %v789 = vmin.f32 %v785, %v756
        %v790 = vmin.f32 %v786, %v757
        %v791 = vmin.f32 %v787, %v758
        %v792 = vmin.f32 %v788, %v789
        %v793 = vmin.f32 %v790, %v791
        %v794 = vmin.f32 %v792, %v793
        %v795 = vrot.slane %v794, 4
        %v796 = vmin.f32 %v794, %v795
        %v797 = vrot.slane %v796, 2
        %v798 = vmin.f32 %v796, %v797
        %v799 = vrot.slane %v798, 1
        %v800 = vmin.f32 %v798, %v799
        %vm801 = vcmask 1040384
        %v802 = vsel %vm801, %v779, %v800
        %803 = vst [vmem:[%s242] sm:$0x3] %v802
        %s804 = sand.u32 %s102, 1
        %s805 = scalar_lea.sflag [#allocation4], %s804
        %s806 = sand.u32 %s102, 1
        %s807 = smul.addr %s806, 128
        %s808 = scalar_lea.vmem [#allocation7], %s807
        %s809 = sand.u32 %s128, 1
        %s810 = scalar_lea.sflag [#allocation9], %s809
        %s811 = sand.u32 %s128, 1
        %s812 = smul.addr %s811, 2
        %s813 = scalar_lea.vmem [#allocation8], %s812
        // Predicated region
        $region41: #{tpu_custom_call.1} parent=31 // pred_check
          %p814 = pneg %p112
        $region42: #{tpu_custom_call.1} parent=31 // pred_check_branch
          %816 = sbr.rel (%p814) target = $region44
        $region43: #{tpu_custom_call.1} parent=31 // pred_region
          %s817 = smul.u32 16, %s26
          %s819 = ssub.s32 2048, 2048
          %820 = vsyncadd %s805, %s819
          %s821 = smul.addr %s817, 128
          %s822 = scalar_lea.hbm %s3, %s821
          %s823 = sshll.u32 %s808, 4
          %s824 = int_to_ptr.vmem [resolvable:$true] %s823
          %829 = dma.vmem_to_hbm [thread:$0]  %s824, 2048, %s822, %s805, 128, 128, 8
        $region44: #{tpu_custom_call.1} parent=31 // pred_fallthru
          _
        // Predicated region
        $region45: #{tpu_custom_call.1} parent=31 // pred_check
          %p830 = pneg %p138
        $region46: #{tpu_custom_call.1} parent=31 // pred_check_branch
          %832 = sbr.rel (%p830) target = $region48
        $region47: #{tpu_custom_call.1} parent=31 // pred_region
          %s834 = ssub.s32 32, 32
          %835 = vsyncadd %s810, %s834
          %s836 = smul.addr %s26, 32
          %s837 = scalar_lea.hbm %s4, %s836
          %s839 = sshll.u32 %s813, 4
          %s840 = int_to_ptr.vmem [resolvable:$true] %s839
          %842 = dma.vmem_to_hbm [thread:$0]  %s840, 32, %s837, %s810
        $region48: #{tpu_custom_call.1} parent=31 // pred_fallthru
          _
      $region32: #{tpu_custom_call.1} parent=5 // pred_fallthru
        _
      %p843 = scmp.le.s32.totalorder 2, %s21
      // Predicated region
      $region49: #{tpu_custom_call.1} parent=5 // pred_check
        %p844 = pneg %p843
      $region50: #{tpu_custom_call.1} parent=5 // pred_check_branch
        %846 = sbr.rel (%p844) target = $region52
      $region51: #{tpu_custom_call.1} parent=5 // pred_region
        %s847 = ssub.s32 %s21, 2
        // Predicated region
        $region53: #{tpu_custom_call.1} parent=51 // pred_check
          %p848 = pneg %p118
        $region54: #{tpu_custom_call.1} parent=51 // pred_check_branch
          %850 = sbr.rel (%p848) target = $region56
        $region55: #{tpu_custom_call.1} parent=51 // pred_region
          %s851 = sand.u32 %s103, 1
          %s852 = scalar_lea.sflag [#allocation4], %s851
          %s853 = sand.u32 %s103, 1
          %s854 = smul.addr %s853, 128
          %s855 = scalar_lea.vmem [#allocation7], %s854
          %856 = dma.done %s852, 2048
        $region56: #{tpu_custom_call.1} parent=51 // pred_fallthru
          _
        // Predicated region
        $region57: #{tpu_custom_call.1} parent=51 // pred_check
          %p857 = pneg %p144
        $region58: #{tpu_custom_call.1} parent=51 // pred_check_branch
          %859 = sbr.rel (%p857) target = $region60
        $region59: #{tpu_custom_call.1} parent=51 // pred_region
          %s860 = sand.u32 %s129, 1
          %s861 = scalar_lea.sflag [#allocation9], %s860
          %s862 = sand.u32 %s129, 1
          %s863 = smul.addr %s862, 2
          %s864 = scalar_lea.vmem [#allocation8], %s863
          %865 = dma.done %s861, 32
        $region60: #{tpu_custom_call.1} parent=51 // pred_fallthru
          _
      $region52: #{tpu_custom_call.1} parent=5 // pred_fallthru
        _
    $region6: #{tpu_custom_call.1} parent=1 // loop_footer
      %s25 = sadd.s32 1, %s21
    $region7: #{tpu_custom_call.1} parent=1 // loop_footer_branch
      %20 = sbr.rel target = $region3
    $region8: #{tpu_custom_call.1} parent=1 // loop_exit
      _
    %866 = vsyncpa [#allocation3], 1
    %s867 = scalar_lea.sflag [#allocation3], 1
    %868 = vsyncpa %s867, 1
    %869 = vsyncpa [#allocation6], 1
    %870 = vsyncpa [#allocation4], 1
    %s871 = scalar_lea.sflag [#allocation4], 1
    %872 = vsyncpa %s871, 1
    %873 = vsyncpa [#allocation9], 1
    %s874 = scalar_lea.sflag [#allocation9], 1
    %875 = vsyncpa %s874, 1

</llo_original>
